<compile_context>
chip_gen: v7x
topology: tpu7x:2x2x1
jax: 0.10.0
libtpu: 0.0.40
codegen_flags: <defaults>
</compile_context>

<pallas_src>
import functools

import jax
import jax.numpy as jnp
from jax.experimental import pallas as pl
from jax.experimental.pallas import tpu as pltpu

_TARGET_BLOCK_BYTES = 4 * 1024 * 1024  # multi-MiB input blocks ~ HBM roofline


def _temp_softmax_kernel(temp_ref, x_ref, o_ref):
    # temp_ref: (1,) f32 temperature in SMEM
    # x_ref/o_ref: (tile_n, C) block in VMEM (C == full class dim, no padding)
    inv_t = 1.0 / temp_ref[0]                              # one scalar divide
    z = x_ref[...].astype(jnp.float32) * inv_t             # VPU multiply
    z = z - jnp.max(z, axis=1, keepdims=True)              # numerically stable
    e = jnp.exp(z)                                         # EUP
    denom = jnp.sum(e, axis=1, keepdims=True)              # XLU reduce
    inv_denom = pl.reciprocal(denom, approx=False)         # exact; tiny (tile_n,1)
    o_ref[...] = (e * inv_denom).astype(o_ref.dtype)       # dense store


def _round_up(x, m):
    return ((x + m - 1) // m) * m


def _sublane_multiple(dtype):
    itemsize = jnp.dtype(dtype).itemsize
    if itemsize >= 4:
        return 8
    if itemsize == 2:
        return 16
    return 32


def _vmem_capacity_bytes():
    try:
        return int(pltpu.get_tpu_info().vmem_capacity_bytes)
    except Exception:
        pass
    try:
        kind = jax.devices()[0].device_kind.lower()
        if "v7" in kind:
            return 64 * 1024 * 1024       # v7x: 64 MiB per TensorCore
        return 128 * 1024 * 1024          # v5e / v6e: 128 MiB
    except Exception:
        return 64 * 1024 * 1024           # conservative last resort


def _pick_tile_n(N, C, dtype):
    itemsize = jnp.dtype(dtype).itemsize
    sub = _sublane_multiple(dtype)
    row_bytes = max(C * itemsize, 1)

    vmem_cap = _vmem_capacity_bytes()
    # Per-row VMEM cost: double-buffered input + double-buffered output
    # + ~3 f32-sized temporaries inside the kernel.
    bytes_per_row = C * (4 * itemsize + 12)
    budget = int(0.4 * vmem_cap)
    max_rows_vmem = (budget // bytes_per_row) // sub * sub
    if max_rows_vmem < sub:
        # TODO(synk): for extremely large class counts, tile C with an online
        # (running max + running sum) softmax instead of erroring out.
        raise ValueError(
            f"TemperatureScaling kernel: class dim C={C} is too large for a "
            f"single-row-block softmax within the {vmem_cap >> 20} MiB VMEM "
            f"budget on this TPU generation."
        )

    # Multi-MiB input blocks amortize the per-grid-step overhead.
    target_rows = max(sub, (_TARGET_BLOCK_BYTES // row_bytes) // sub * sub)
    tile_n = max(sub, min(target_rows, max_rows_vmem))
    tile_n = min(tile_n, _round_up(N, sub))

    # Prefer >= 2 grid steps for non-trivial problems so v7x's two TensorCores
    # both get work under dimension_semantics=("parallel",).
    if N >= 2 * sub and N * row_bytes >= (1 << 20):
        half = max(sub, _round_up(-(-N // 2), sub))
        tile_n = min(tile_n, half)
    return tile_n, sub, vmem_cap


@functools.partial(jax.jit, static_argnames=("donate_logits",))
def temperature_scaling_forward(logits, temperature, *, donate_logits=False):
    """softmax(logits / temperature, axis=1) via a Pallas TPU kernel.

    logits:      (N, C) array (f32 or bf16)
    temperature: (1,) array (nn.Parameter equivalent)
    donate_logits: if True, alias the output onto the logits HBM buffer
                   (only safe if the caller does not reuse `logits`).
    """
    N, C = logits.shape
    out_dtype = logits.dtype

    tile_n, _, vmem_cap = _pick_tile_n(N, C, out_dtype)
    grid = (pl.cdiv(N, tile_n),)
    vmem_limit = int(min(0.8 * vmem_cap, 120 * 1024 * 1024))

    kwargs = {}
    if donate_logits:
        # inputs are (temperature, logits) -> logits is input index 1.
        kwargs["input_output_aliases"] = {1: 0}

    out = pl.pallas_call(
        _temp_softmax_kernel,
        out_shape=jax.ShapeDtypeStruct((N, C), out_dtype),
        grid_spec=pltpu.PrefetchScalarGridSpec(
            num_scalar_prefetch=0,
            grid=grid,
            in_specs=[
                pl.BlockSpec(memory_space=pltpu.SMEM),         # temperature
                pl.BlockSpec((tile_n, C), lambda i: (i, 0)),   # logits row tile
            ],
            out_specs=pl.BlockSpec((tile_n, C), lambda i: (i, 0)),
        ),
        compiler_params=pltpu.CompilerParams(
            dimension_semantics=("parallel",),   # shards row tiles across TCs
            vmem_limit_bytes=vmem_limit,
        ),
        **kwargs,
    )(temperature.astype(jnp.float32), logits)

    return out


if __name__ == "__main__":
    key = jax.random.PRNGKey(0)

    # Small shapes consistent with the module: a batch of logits, 32 classes.
    N, C = 8, 32
    logits = jax.random.normal(key, (N, C), dtype=jnp.float32)

    # Deterministic parameter init: temperature = 1.5 (nn.Parameter of shape (1,))
    temperature = jnp.ones((1,), dtype=jnp.float32) * 1.5

    out = temperature_scaling_forward(logits, temperature)
    out = jax.block_until_ready(out)

    ref = jax.nn.softmax(logits / temperature[0], axis=1)
    assert out.shape == (N, C)
    assert jnp.allclose(out, ref, atol=1e-5, rtol=1e-5)
    assert jnp.allclose(jnp.sum(out, axis=1), 1.0, atol=1e-5)

    # Ragged shape (N not a multiple of 8, C not a multiple of 128):
    # exercises the in-kernel ragged last row-block path (no wrapper padding).
    N2, C2 = 20, 40
    logits2 = jax.random.normal(jax.random.PRNGKey(1), (N2, C2), dtype=jnp.float32)
    out2 = jax.block_until_ready(temperature_scaling_forward(logits2, temperature))
    ref2 = jax.nn.softmax(logits2 / temperature[0], axis=1)
    assert out2.shape == (N2, C2)
    assert jnp.allclose(out2, ref2, atol=1e-5, rtol=1e-5)

    # bf16 logits: exercises the 16-row sublane multiple path.
    N3, C3 = 16, 40
    logits3 = jax.random.normal(jax.random.PRNGKey(2), (N3, C3), dtype=jnp.bfloat16)
    out3 = jax.block_until_ready(temperature_scaling_forward(logits3, temperature))
    ref3 = jax.nn.softmax(logits3.astype(jnp.float32) / temperature[0], axis=1)
    assert out3.shape == (N3, C3)
    assert jnp.allclose(out3.astype(jnp.float32), ref3, atol=2e-2, rtol=2e-2)

    # TODO(synk): set_temperature (LBFGS NLL calibration) is a host-side training
    # loop, not a kernel; only the forward pass is implemented here.
    print("KERNEL_OK")
</pallas_src>

<mosaic_0001>
module attributes {stable_mosaic.version = 11 : i64} {
  func.func @_temp_softmax_kernel(%arg0: i32, %arg1: memref<1xf32, #tpu.memory_space<smem>>, %arg2: memref<8x32xf32, #tpu.memory_space<vmem>>, %arg3: memref<8x32xf32, #tpu.memory_space<vmem>>) attributes {dimension_semantics = [#tpu.dimension_semantics<parallel>], iteration_bounds = array<i64: 1>, scalar_prefetch = 0 : i64, scratch_operands = 0 : i64, tpu.core_type = #tpu.core_type<tc>, window_params = [{transform_indices = @transform_0, window_bounds = array<i64: 1>}, {transform_indices = @transform_1, window_bounds = array<i64: 8, 32>}, {transform_indices = @transform_2, window_bounds = array<i64: 8, 32>}]} {
    %c0 = arith.constant 0 : index
    %0 = memref.load %arg1[%c0] : memref<1xf32, #tpu.memory_space<smem>>
    %cst = arith.constant 1.000000e+00 : f32
    %1 = arith.divf %cst, %0 : f32
    %c0_0 = arith.constant 0 : index
    %c0_1 = arith.constant 0 : index
    %2 = vector.load %arg2[%c0_0, %c0_1] : memref<8x32xf32, #tpu.memory_space<vmem>>, vector<8x32xf32>
    %3 = vector.broadcast %1 : f32 to vector<8x32xf32>
    %4 = arith.mulf %2, %3 : vector<8x32xf32>
    %cst_2 = arith.constant dense<0xFF800000> : vector<8xf32>
    %5 = vector.multi_reduction <maximumf>, %4, %cst_2 [1] : vector<8x32xf32> to vector<8xf32>
    %6 = vector.shape_cast %5 : vector<8xf32> to vector<8x1xf32>
    %7 = vector.broadcast %6 : vector<8x1xf32> to vector<8x32xf32>
    %8 = arith.subf %4, %7 : vector<8x32xf32>
    %9 = math.exp %8 : vector<8x32xf32>
    %cst_3 = arith.constant dense<0.000000e+00> : vector<8xf32>
    %10 = vector.multi_reduction <add>, %9, %cst_3 [1] : vector<8x32xf32> to vector<8xf32>
    %11 = vector.shape_cast %10 : vector<8xf32> to vector<8x1xf32>
    %12 = tpu.reciprocal %11 : vector<8x1xf32> -> vector<8x1xf32>
    %13 = vector.broadcast %12 : vector<8x1xf32> to vector<8x32xf32>
    %14 = arith.mulf %9, %13 : vector<8x32xf32>
    %c0_4 = arith.constant 0 : index
    %c0_5 = arith.constant 0 : index
    %15 = vector.load %arg3[%c0_4, %c0_5] : memref<8x32xf32, #tpu.memory_space<vmem>>, vector<8x32xf32>
    tpu.vector_store %arg3[%c0_4, %c0_5], %14 {strides = array<i32>} : memref<8x32xf32, #tpu.memory_space<vmem>>, vector<8x32xf32>,
    return
  }
  func.func @transform_0(%arg0: i32) -> i32 {
    %c0_i32 = arith.constant 0 : i32
    %c0_i32_0 = arith.constant 0 : i32
    return %c0_i32 : i32
  }
  func.func @transform_1(%arg0: i32) -> (i32, i32) {
    %c0_i32 = arith.constant 0 : i32
    %c0_i32_0 = arith.constant 0 : i32
    return %arg0, %c0_i32 : i32, i32
  }
  func.func @transform_2(%arg0: i32) -> (i32, i32) {
    %c0_i32 = arith.constant 0 : i32
    %c0_i32_0 = arith.constant 0 : i32
    return %arg0, %c0_i32 : i32, i32
  }
}

</mosaic_0001>

<llo_original>
// kernel: temperature_scaling_forward.1
$region0: #{temperature_scaling_forward.1}
  #allocation0 [shape = 'u32[]', space=smem, size = 0x4, offset = 0x4, fixed_abs, tag = 'smem constant byte address 0x4 - core index']
  #allocation1 [shape = 'u32[144,128]{1,0:T(1,128)}', space=vmem, size = 0x12000, scoped, tag = 'internal scratch']
  #allocation2 [shape = 'f32[1]{0:T(128)S(6)}', space=smem, size = 0x200, scoped, tag = 'scoped memory for temperature_scaling_forward.1']
  %s0 = inlined_call_operand.<no memory space> [shape: f32[1], index: 0, kind: input, shape index: {}]
  %s1 = inlined_call_operand.hbm [shape: f32[8,32], index: 1, kind: input, shape index: {}]
  %s2 = inlined_call_operand.hbm [shape: f32[8,32], index: 2, kind: output, shape index: {}]
  %s3 = sld [smem:[#allocation0]]
  $region22: #{temperature_scaling_forward.1} parent=0
    _
  %s5 = ssub.s32 1, %s3
  %s6 = scalar_select 0, %s5, %s3
  %7 = sst [smem:[#allocation2]] %s0
  $region1: #{temperature_scaling_forward.1} parent=0
    #allocation3 [shape = 'u8[4096]{0}', space=vmem, size = 0x1000, scoped, tag = 'input window, operand 1, single buffered']
    #allocation4 [shape = 's32[1]{0}', space=sflag, size = 0x4, scoped, tag = 'scoped memory for temperature_scaling_forward.1']
    #allocation5 [shape = 's32[1]{0}', space=sflag, size = 0x4, scoped, tag = 'scoped memory for temperature_scaling_forward.1']
    #allocation6 [shape = 'u8[4096]{0}', space=vmem, size = 0x1000, scoped, tag = 'output window, operand 0, single buffered']
    %8 = vsyncpa [#allocation4], 0
    %9 = vsyncpa [#allocation5], 0
    // Predicated region
    $region2: #{temperature_scaling_forward.1} parent=1 // pred_check
      _
    $region3: #{temperature_scaling_forward.1} parent=1 // pred_check_branch
      %11 = sbr.rel (0) target = $region5
    $region4: #{temperature_scaling_forward.1} parent=1 // pred_region
      _
    $region5: #{temperature_scaling_forward.1} parent=1 // pred_fallthru
      _
    // Predicated region
    $region6: #{temperature_scaling_forward.1} parent=1 // pred_check
      _
    $region7: #{temperature_scaling_forward.1} parent=1 // pred_check_branch
      %13 = sbr.rel (0) target = $region9
    $region8: #{temperature_scaling_forward.1} parent=1 // pred_region
      %s15 = ssub.s32 128, 128
      %16 = vsyncadd [#allocation4], %s15
      %s18 = sshll.u32 [#allocation3], 4
      %s19 = int_to_ptr.vmem [resolvable:$true] %s18
      %21 = dma.hbm_to_vmem [thread:$0]  %s1, 128, %s19, [#allocation4]
    $region9: #{temperature_scaling_forward.1} parent=1 // pred_fallthru
      _
    // Predicated region
    $region10: #{temperature_scaling_forward.1} parent=1 // pred_check
      _
    $region11: #{temperature_scaling_forward.1} parent=1 // pred_check_branch
      %23 = sbr.rel (0) target = $region13
    $region12: #{temperature_scaling_forward.1} parent=1 // pred_region
      %24 = dma.done [#allocation4], 128
    $region13: #{temperature_scaling_forward.1} parent=1 // pred_fallthru
      _
    %s25 = sld [smem:[#allocation2]]
    %v26 = vstv %s25
    %v27 = vrcp.pop %v26
    %s28 = vtos %v27
    %v29 = vld [vmem:[#allocation3] sm:$0xff]
    %v30 = vstv %s28
    %v31 = vmul.f32 %v29, %v30
    %vm32 = vcmask 261120
    %v33 = vsel %vm32, %v31, -inf
    %34 = vmax.xlane.f32.xlu0 %v33
    %v35 = vpop.xlane.xlu0 %34
    %v36 = vsub.f32 %v31, %v35
    %v37 = vmul.f32 %v36, 1.442695
    %v38 = vpow.pop %v37
    %v39 = vsel %vm32, %v38, 0.0
    %40 = vadd.xlane.f32.xlu0 %v39
    %v41 = vpop.xlane.xlu0 %40
    %v42 = vrcp.pop %v41
    %v43 = vmul.f32 %v38, %v42
    %44 = vst.msk [vmem:[#allocation6] sm:$0xff] %vm32, %v43
    // Predicated region
    $region14: #{temperature_scaling_forward.1} parent=1 // pred_check
      _
    $region15: #{temperature_scaling_forward.1} parent=1 // pred_check_branch
      %46 = sbr.rel (0) target = $region17
    $region16: #{temperature_scaling_forward.1} parent=1 // pred_region
      %s48 = ssub.s32 128, 128
      %49 = vsyncadd [#allocation5], %s48
      %s51 = sshll.u32 [#allocation6], 4
      %s52 = int_to_ptr.vmem [resolvable:$true] %s51
      %54 = dma.vmem_to_hbm [thread:$0]  %s52, 128, %s2, [#allocation5]
    $region17: #{temperature_scaling_forward.1} parent=1 // pred_fallthru
      _
    // Predicated region
    $region18: #{temperature_scaling_forward.1} parent=1 // pred_check
      _
    $region19: #{temperature_scaling_forward.1} parent=1 // pred_check_branch
      %56 = sbr.rel (0) target = $region21
    $region20: #{temperature_scaling_forward.1} parent=1 // pred_region
      %57 = dma.done [#allocation5], 128
    $region21: #{temperature_scaling_forward.1} parent=1 // pred_fallthru
      _
    %58 = vsyncpa [#allocation4], 1
    %59 = vsyncpa [#allocation5], 1

</llo_original>
